<compile_context>
chip_gen: v7x
topology: tpu7x:2x2x1
jax: 0.10.0
libtpu: 0.0.40
codegen_flags: <defaults>
</compile_context>

<pallas_src>
import jax
import jax.numpy as jnp
from jax.experimental import pallas as pl
from jax.experimental.pallas import tpu as pltpu


def _nonlocal_kernel(x_ref, w_ref, out_ref):
    # x_ref/out_ref block: (1, C, HW); w_ref: (8C, C) packed weights.
    _, C, HW = x_ref.shape
    HW2 = HW // 2

    x = x_ref[0]                         # (C, HW) f32
    xl = x[:, :HW2]                      # left spatial half  (lane-aligned when HW2 % 128 == 0)
    xr = x[:, HW2:]                      # right spatial half

    wl = w_ref[0:3 * C, :]               # phi/theta/g weights acting on xl  (3C, C)
    wr = w_ref[3 * C:6 * C, :]           # phi/theta/g weights acting on xr  (3C, C)
    wm = w_ref[6 * C:8 * C, :]           # conv_mask weights (even/odd rows) (2C, C)

    # 1x1 convs, already expressed in the module's reshaped-channel space.
    ptg = (jnp.dot(wl, xl, preferred_element_type=jnp.float32)
           + jnp.dot(wr, xr, preferred_element_type=jnp.float32))      # (3C, HW2)
    phi_r = ptg[0:C]
    theta_r = ptg[C:2 * C]
    g_r = ptg[2 * C:3 * C]

    # logits^T[u, t] = sum_c phi_r[c, u] * theta_r[c, t]  (== matmul(x_theta, x_phi).T)
    logits_t = jax.lax.dot_general(
        phi_r, theta_r,
        dimension_numbers=(((0,), (0,)), ((), ())),
        preferred_element_type=jnp.float32)                            # (HW2, HW2)

    # torch softmax(dim=1) of logits  ==  softmax over the LAST (lane) axis of logits^T.
    m = jnp.max(logits_t, axis=-1, keepdims=True)
    e = jnp.exp(logits_t - m)
    attn_t = e * pl.reciprocal(jnp.sum(e, axis=-1, keepdims=True), approx=True)

    # z[p, t] = sum_u g_r[p, u] * attn^T[u, t]   (== (attn @ x_g) transposed)
    z = jnp.dot(g_r, attn_t, preferred_element_type=jnp.float32)       # (C, HW2)

    # conv_mask: even/odd reshaped channels feed left/right spatial halves.
    mask_lr = jnp.dot(wm, z, preferred_element_type=jnp.float32)       # (2C, HW2)
    mask = jnp.concatenate([mask_lr[0:C], mask_lr[C:2 * C]], axis=-1)  # (C, HW)

    out_ref[0] = x + mask

    # TODO(synk): for large H*W, tile the HW/2 attention axis with a flash-style
    # online softmax so the (HW/2, HW/2) matrix never fully materializes in VMEM
    # (needed to stay under v7x's 64 MiB VMEM at realistic spatial sizes).


def _pack_weights(w_phi, w_theta, w_g, w_mask):
    """Pack the four 1x1-conv weights into one (8C, C) slab (single DMA).

    The zero-interleaving reproduces the module's `.view(b, c, -1)` reshape of the
    C//2-channel conv outputs, so the kernel needs no in-kernel reshape/transpose.
    """
    C2, C = w_phi.shape

    def rows_at(w, parity):            # (C2, C) -> (C, C) with rows at 2o+parity
        return jnp.zeros((C, C), w.dtype).at[parity::2, :].set(w)

    wl = jnp.concatenate([rows_at(w_phi, 0), rows_at(w_theta, 0), rows_at(w_g, 0)], axis=0)
    wr = jnp.concatenate([rows_at(w_phi, 1), rows_at(w_theta, 1), rows_at(w_g, 1)], axis=0)

    wme = jnp.zeros((C, C), w_mask.dtype).at[:, 0::2].set(w_mask)      # even reshaped channels
    wmo = jnp.zeros((C, C), w_mask.dtype).at[:, 1::2].set(w_mask)      # odd  reshaped channels
    wm = jnp.concatenate([wme, wmo], axis=0)

    return jnp.concatenate([wl, wr, wm], axis=0)                       # (8C, C)


@jax.jit
def nonlocal_block_pallas(x_nchw, w_phi, w_theta, w_g, w_mask):
    B, C, H, W = x_nchw.shape
    HW = H * W
    assert C % 2 == 0 and HW % 2 == 0, "NonLocalBlock requires even C and even H*W"

    x = x_nchw.reshape(B, C, HW).astype(jnp.float32)   # native layout, no transpose
    w_all = _pack_weights(w_phi.astype(jnp.float32), w_theta.astype(jnp.float32),
                          w_g.astype(jnp.float32), w_mask.astype(jnp.float32))

    out = pl.pallas_call(
        _nonlocal_kernel,
        out_shape=jax.ShapeDtypeStruct((B, C, HW), jnp.float32),
        grid=(B,),
        in_specs=[
            pl.BlockSpec((1, C, HW), lambda b: (b, 0, 0)),
            pl.BlockSpec((8 * C, C), lambda b: (0, 0)),
        ],
        out_specs=pl.BlockSpec((1, C, HW), lambda b: (b, 0, 0)),
        compiler_params=pltpu.CompilerParams(dimension_semantics=("parallel",)),
    )(x, w_all)

    return out.reshape(B, C, H, W)


def nonlocal_block_reference(x, w_phi, w_theta, w_g, w_mask):
    """Pure-JAX mirror of the PyTorch forward (including its reshapes)."""
    B, C, H, W = x.shape
    C2 = C // 2
    HW = H * W
    HW2 = HW // 2
    xs = x.reshape(B, C, HW)
    phi = jnp.einsum("oc,bcs->bos", w_phi, xs).reshape(B, C, HW2)
    theta = jnp.einsum("oc,bcs->bos", w_theta, xs).reshape(B, C, HW2).transpose(0, 2, 1)
    g = jnp.einsum("oc,bcs->bos", w_g, xs).reshape(B, C, HW2).transpose(0, 2, 1)
    attn = jax.nn.softmax(jnp.einsum("btc,bcu->btu", theta, phi), axis=1)
    y = jnp.einsum("btu,buc->btc", attn, g)
    m = y.transpose(0, 2, 1).reshape(B, C2, H, W)
    mask = jnp.einsum("io,bohw->bihw", w_mask, m)
    return mask + x


if __name__ == "__main__":
    # Small shapes consistent with the module: in_channels=8 -> inter_channel=4.
    B, C, H, W = 2, 8, 16, 16          # HW = 256 (lane-dense), HW/2 = 128
    C2 = C // 2

    key = jax.random.PRNGKey(0)
    k = jax.random.split(key, 5)
    x = jax.random.normal(k[0], (B, C, H, W), dtype=jnp.float32)
    w_phi = 0.1 * jax.random.normal(k[1], (C2, C), dtype=jnp.float32)    # Conv2d(C, C//2, 1), no bias
    w_theta = 0.1 * jax.random.normal(k[2], (C2, C), dtype=jnp.float32)  # Conv2d(C, C//2, 1), no bias
    w_g = 0.1 * jax.random.normal(k[3], (C2, C), dtype=jnp.float32)      # Conv2d(C, C//2, 1), no bias
    w_mask = 0.1 * jax.random.normal(k[4], (C, C2), dtype=jnp.float32)   # Conv2d(C//2, C, 1), no bias

    out = jax.block_until_ready(nonlocal_block_pallas(x, w_phi, w_theta, w_g, w_mask))
    ref = jax.block_until_ready(nonlocal_block_reference(x, w_phi, w_theta, w_g, w_mask))

    assert out.shape == (B, C, H, W)
    max_err = float(jnp.max(jnp.abs(out - ref)))
    # Tolerance loosened slightly for the EUP approx reciprocal in the softmax.
    assert jnp.allclose(out, ref, atol=1e-3, rtol=1e-3), max_err
    print("KERNEL_OK")
</pallas_src>

<mosaic_0001>
module attributes {stable_mosaic.version = 11 : i64} {
  func.func @_nonlocal_kernel(%arg0: i32, %arg1: memref<1x8x256xf32, #tpu.memory_space<vmem>>, %arg2: memref<64x8xf32, #tpu.memory_space<vmem>>, %arg3: memref<1x8x256xf32, #tpu.memory_space<vmem>>) attributes {dimension_semantics = [#tpu.dimension_semantics<parallel>], iteration_bounds = array<i64: 2>, scalar_prefetch = 0 : i64, scratch_operands = 0 : i64, tpu.core_type = #tpu.core_type<tc>, window_params = [{transform_indices = @transform_0, window_bounds = array<i64: 1, 8, 256>}, {pipeline_mode = #tpu.pipeline_mode<synchronous>, transform_indices = @transform_1, window_bounds = array<i64: 64, 8>}, {transform_indices = @transform_2, window_bounds = array<i64: 1, 8, 256>}]} {
    %c0 = arith.constant 0 : index
    %c0_0 = arith.constant 0 : index
    %c0_1 = arith.constant 0 : index
    %0 = vector.load %arg1[%c0, %c0_0, %c0_1] : memref<1x8x256xf32, #tpu.memory_space<vmem>>, vector<1x8x256xf32>
    %1 = vector.shape_cast %0 : vector<1x8x256xf32> to vector<8x256xf32>
    %2 = vector.extract_strided_slice %1 {offsets = [0, 0], sizes = [8, 128], strides = [1, 1]} : vector<8x256xf32> to vector<8x128xf32>
    %3 = vector.extract_strided_slice %1 {offsets = [0, 128], sizes = [8, 128], strides = [1, 1]} : vector<8x256xf32> to vector<8x128xf32>
    %c0_2 = arith.constant 0 : index
    %c0_3 = arith.constant 0 : index
    %4 = vector.load %arg2[%c0_2, %c0_3] : memref<64x8xf32, #tpu.memory_space<vmem>>, vector<24x8xf32>
    %c24 = arith.constant 24 : index
    %c0_4 = arith.constant 0 : index
    %5 = vector.load %arg2[%c24, %c0_4] : memref<64x8xf32, #tpu.memory_space<vmem>>, vector<24x8xf32>
    %c48 = arith.constant 48 : index
    %c0_5 = arith.constant 0 : index
    %6 = vector.load %arg2[%c48, %c0_5] : memref<64x8xf32, #tpu.memory_space<vmem>>, vector<16x8xf32>
    %cst = arith.constant dense<0.000000e+00> : vector<24x128xf32>
    %7 = tpu.matmul %4, %2, %cst {dimension_numbers = #tpu.dot_dimension_numbers<[1], [0], [0], [1], [0, 0, 1, 1], [], []>} : vector<24x8xf32>, vector<8x128xf32>, vector<24x128xf32> -> vector<24x128xf32>
    %cst_6 = arith.constant dense<0.000000e+00> : vector<24x128xf32>
    %8 = tpu.matmul %5, %3, %cst_6 {dimension_numbers = #tpu.dot_dimension_numbers<[1], [0], [0], [1], [0, 0, 1, 1], [], []>} : vector<24x8xf32>, vector<8x128xf32>, vector<24x128xf32> -> vector<24x128xf32>
    %9 = arith.addf %7, %8 : vector<24x128xf32>
    %10 = vector.extract_strided_slice %9 {offsets = [0, 0], sizes = [8, 128], strides = [1, 1]} : vector<24x128xf32> to vector<8x128xf32>
    %11 = vector.extract_strided_slice %9 {offsets = [8, 0], sizes = [8, 128], strides = [1, 1]} : vector<24x128xf32> to vector<8x128xf32>
    %12 = vector.extract_strided_slice %9 {offsets = [16, 0], sizes = [8, 128], strides = [1, 1]} : vector<24x128xf32> to vector<8x128xf32>
    %cst_7 = arith.constant dense<0.000000e+00> : vector<128x128xf32>
    %13 = tpu.matmul %10, %11, %cst_7 {dimension_numbers = #tpu.dot_dimension_numbers<[0], [0], [1], [1], [0, 1, 1, 1], [], []>} : vector<8x128xf32>, vector<8x128xf32>, vector<128x128xf32> -> vector<128x128xf32>
    %cst_8 = arith.constant dense<0xFF800000> : vector<128xf32>
    %14 = vector.multi_reduction <maximumf>, %13, %cst_8 [1] : vector<128x128xf32> to vector<128xf32>
    %15 = vector.shape_cast %14 : vector<128xf32> to vector<128x1xf32>
    %16 = vector.broadcast %15 : vector<128x1xf32> to vector<128x128xf32>
    %17 = arith.subf %13, %16 : vector<128x128xf32>
    %18 = math.exp %17 : vector<128x128xf32>
    %cst_9 = arith.constant dense<0.000000e+00> : vector<128xf32>
    %19 = vector.multi_reduction <add>, %18, %cst_9 [1] : vector<128x128xf32> to vector<128xf32>
    %20 = vector.shape_cast %19 : vector<128xf32> to vector<128x1xf32>
    %21 = tpu.reciprocal %20 {approx = true} : vector<128x1xf32> -> vector<128x1xf32>
    %22 = vector.broadcast %21 : vector<128x1xf32> to vector<128x128xf32>
    %23 = arith.mulf %18, %22 : vector<128x128xf32>
    %cst_10 = arith.constant dense<0.000000e+00> : vector<8x128xf32>
    %24 = tpu.matmul %12, %23, %cst_10 {dimension_numbers = #tpu.dot_dimension_numbers<[1], [0], [0], [1], [0, 0, 1, 1], [], []>} : vector<8x128xf32>, vector<128x128xf32>, vector<8x128xf32> -> vector<8x128xf32>
    %cst_11 = arith.constant dense<0.000000e+00> : vector<16x128xf32>
    %25 = tpu.matmul %6, %24, %cst_11 {dimension_numbers = #tpu.dot_dimension_numbers<[1], [0], [0], [1], [0, 0, 1, 1], [], []>} : vector<16x8xf32>, vector<8x128xf32>, vector<16x128xf32> -> vector<16x128xf32>
    %26 = vector.extract_strided_slice %25 {offsets = [0, 0], sizes = [8, 128], strides = [1, 1]} : vector<16x128xf32> to vector<8x128xf32>
    %27 = vector.extract_strided_slice %25 {offsets = [8, 0], sizes = [8, 128], strides = [1, 1]} : vector<16x128xf32> to vector<8x128xf32>
    %28 = tpu.concatenate %26, %27 in 1 : vector<8x128xf32>, vector<8x128xf32> -> vector<8x256xf32>
    %29 = arith.addf %1, %28 : vector<8x256xf32>
    %c0_12 = arith.constant 0 : index
    %c0_13 = arith.constant 0 : index
    %c0_14 = arith.constant 0 : index
    %30 = vector.load %arg3[%c0_12, %c0_13, %c0_14] : memref<1x8x256xf32, #tpu.memory_space<vmem>>, vector<1x8x256xf32>
    %31 = vector.shape_cast %30 : vector<1x8x256xf32> to vector<8x256xf32>
    %32 = vector.shape_cast %29 : vector<8x256xf32> to vector<1x8x256xf32>
    tpu.vector_store %arg3[%c0_12, %c0_13, %c0_14], %32 {strides = array<i32>} : memref<1x8x256xf32, #tpu.memory_space<vmem>>, vector<1x8x256xf32>,
    return
  }
  func.func @transform_0(%arg0: i32) -> (i32, i32, i32) {
    %c0_i32 = arith.constant 0 : i32
    %c0_i32_0 = arith.constant 0 : i32
    %c0_i32_1 = arith.constant 0 : i32
    return %arg0, %c0_i32, %c0_i32_0 : i32, i32, i32
  }
  func.func @transform_1(%arg0: i32) -> (i32, i32) {
    %c0_i32 = arith.constant 0 : i32
    %c0_i32_0 = arith.constant 0 : i32
    %c0_i32_1 = arith.constant 0 : i32
    return %c0_i32, %c0_i32_0 : i32, i32
  }
  func.func @transform_2(%arg0: i32) -> (i32, i32, i32) {
    %c0_i32 = arith.constant 0 : i32
    %c0_i32_0 = arith.constant 0 : i32
    %c0_i32_1 = arith.constant 0 : i32
    return %arg0, %c0_i32, %c0_i32_0 : i32, i32, i32
  }
}

</mosaic_0001>

<llo_original>
// kernel: nonlocal_block_pallas.1
$region0: #{nonlocal_block_pallas.1}
  #allocation0 [shape = 'u32[]', space=smem, size = 0x4, offset = 0x4, fixed_abs, tag = 'smem constant byte address 0x4 - core index']
  #allocation1 [shape = 'u32[144,128]{1,0:T(1,128)}', space=vmem, size = 0x12000, scoped, tag = 'internal scratch']
  %s0 = inlined_call_operand.vmem [shape: f32[2,8,256], index: 0, kind: input, shape index: {}]
  %s1 = inlined_call_operand.vmem [shape: f32[64,8], index: 1, kind: input, shape index: {}]
  %s2 = inlined_call_operand.vmem [shape: f32[2,8,256], index: 2, kind: output, shape index: {}]
  %s3 = sld [smem:[#allocation0]]
  $region41: #{nonlocal_block_pallas.1} parent=0
    _
  %s5 = ssub.s32 1, %s3
  %s6 = scalar_select 0, %s5, %s3
  loop: start=0, step=1, limit=4
  $region2: #{nonlocal_block_pallas.1} parent=0 // loop_pre_header
    _
  $region3: #{nonlocal_block_pallas.1} parent=0 // loop_header
    %s8 = sphi 0, %s12
    %p9 = scmp.ge.s32.totalorder %s8, 4
    %s18 = sphi 0, %s20
    %s21 = sphi 0, %s18
    %s22 = sphi 0, %s21
    %s38 = sphi 0, %s22
    %s42 = sphi 0, %s42
    %s44 = sphi 0, %s42
    %s45 = sphi 0, %s44
    %s59 = sphi 0, %s45
    %s65 = sphi 0, %s67
    %s68 = sphi 0, %s65
    %s69 = sphi 0, %s68
    %s85 = sphi 0, %s69
  $region4: #{nonlocal_block_pallas.1} parent=0 // loop_header_branch
    %11 = sbr.rel (%p9) target = $region8
  $region5: #{nonlocal_block_pallas.1} parent=0 // loop_body
    %s13 = ssub.s32 %s8, 1
    %s14 = ssub.s32 %s8, 2
    %s15 = sadd.s32 %s8, 1
    %s16 = ssub.s32 %s8, %s15
    %p17 = scmp.eq.s32.totalorder %s16, 0
    %s19 = sadd.s32 %s18, 1
    %s20 = scalar_select %p17, %s18, %s19
    %p23 = pneg %p17
    %p24 = scmp.eq.s32.totalorder %s8, 1
    %p25 = por %p23, %p24
    %p26 = scmp.ne.s32.totalorder %s18, %s21
    %p27 = scmp.eq.s32.totalorder %s8, 0
    %p28 = por %p26, %p27
    %p29 = scmp.ne.s32.totalorder %s18, %s21
    %p30 = scmp.eq.s32.totalorder %s13, 1
    %p31 = por %p29, %p30
    %p32 = scmp.ne.s32.totalorder %s21, %s22
    %p33 = scmp.eq.s32.totalorder %s13, 0
    %p34 = por %p32, %p33
    %p35 = scmp.ne.s32.totalorder %s21, %s22
    %p36 = scmp.eq.s32.totalorder %s14, 1
    %p37 = por %p35, %p36
    %p39 = scmp.ne.s32.totalorder %s22, %s38
    %p40 = scmp.eq.s32.totalorder %s14, 0
    %p41 = por %p39, %p40
    %s43 = sadd.s32 %s42, 1
    %p46 = scmp.eq.s32.totalorder %s8, 1
    %p47 = scmp.ne.s32.totalorder %s42, %s44
    %p48 = scmp.eq.s32.totalorder %s8, 0
    %p49 = por %p47, %p48
    %p50 = scmp.ne.s32.totalorder %s42, %s44
    %p51 = scmp.eq.s32.totalorder %s13, 1
    %p52 = por %p50, %p51
    %p53 = scmp.ne.s32.totalorder %s44, %s45
    %p54 = scmp.eq.s32.totalorder %s13, 0
    %p55 = por %p53, %p54
    %p56 = scmp.ne.s32.totalorder %s44, %s45
    %p57 = scmp.eq.s32.totalorder %s14, 1
    %p58 = por %p56, %p57
    %p60 = scmp.ne.s32.totalorder %s45, %s59
    %p61 = scmp.eq.s32.totalorder %s14, 0
    %p62 = por %p60, %p61
    %s63 = ssub.s32 %s8, %s15
    %p64 = scmp.eq.s32.totalorder %s63, 0
    %s66 = sadd.s32 %s65, 1
    %s67 = scalar_select %p64, %s65, %s66
    %p70 = pneg %p64
    %p71 = scmp.eq.s32.totalorder %s8, 1
    %p72 = por %p70, %p71
    %p73 = scmp.ne.s32.totalorder %s65, %s68
    %p74 = scmp.eq.s32.totalorder %s8, 0
    %p75 = por %p73, %p74
    %p76 = scmp.ne.s32.totalorder %s65, %s68
    %p77 = scmp.eq.s32.totalorder %s13, 1
    %p78 = por %p76, %p77
    %p79 = scmp.ne.s32.totalorder %s68, %s69
    %p80 = scmp.eq.s32.totalorder %s13, 0
    %p81 = por %p79, %p80
    %p82 = scmp.ne.s32.totalorder %s68, %s69
    %p83 = scmp.eq.s32.totalorder %s14, 1
    %p84 = por %p82, %p83
    %p86 = scmp.ne.s32.totalorder %s69, %s85
    %p87 = scmp.eq.s32.totalorder %s14, 0
    %p88 = por %p86, %p87
    %p89 = scmp.le.s32.totalorder 1, %s8
    %p90 = scmp.lt.s32.totalorder %s8, 3
    %p91 = pnand %p89, %p90
    %p92 = pneg %p91
    // Predicated region
    $region9: #{nonlocal_block_pallas.1} parent=5 // pred_check
      _
    $region10: #{nonlocal_block_pallas.1} parent=5 // pred_check_branch
      %94 = sbr.rel (%p91) target = $region12
    $region11: #{nonlocal_block_pallas.1} parent=5 // pred_region
      %s95 = ssub.s32 %s8, 1
      // Predicated region
      $region13: #{nonlocal_block_pallas.1} parent=11 // pred_check
        %p96 = pneg %p55
      $region14: #{nonlocal_block_pallas.1} parent=11 // pred_check_branch
        %98 = sbr.rel (%p96) target = $region16
      $region15: #{nonlocal_block_pallas.1} parent=11 // pred_region
        _
      $region16: #{nonlocal_block_pallas.1} parent=11 // pred_fallthru
        _
    $region12: #{nonlocal_block_pallas.1} parent=5 // pred_fallthru
      _
    %p99 = scmp.lt.s32.totalorder %s8, 2
    // Predicated region
    $region17: #{nonlocal_block_pallas.1} parent=5 // pred_check
      %p100 = pneg %p99
    $region18: #{nonlocal_block_pallas.1} parent=5 // pred_check_branch
      %102 = sbr.rel (%p100) target = $region20
    $region19: #{nonlocal_block_pallas.1} parent=5 // pred_region
      // Predicated region
      $region21: #{nonlocal_block_pallas.1} parent=19 // pred_check
        %p103 = pneg %p28
      $region22: #{nonlocal_block_pallas.1} parent=19 // pred_check_branch
        %105 = sbr.rel (%p103) target = $region24
      $region23: #{nonlocal_block_pallas.1} parent=19 // pred_region
        %p106 = scmp.lt.s32.totalorder %s8, 1
        %s107 = scalar_select %p106, %s8, 1
        %s108 = smul.addr %s107, 2
        %s109 = smul.addr %s108, 8
        %s110 = scalar_lea.vmem %s0, %s109
      $region24: #{nonlocal_block_pallas.1} parent=19 // pred_fallthru
        _
    $region20: #{nonlocal_block_pallas.1} parent=5 // pred_fallthru
      _
    %p111 = scmp.le.s32.totalorder 1, %s8
    %p112 = scmp.lt.s32.totalorder %s8, 3
    %p113 = pnand %p111, %p112
    %p114 = pneg %p113
    // Predicated region
    $region25: #{nonlocal_block_pallas.1} parent=5 // pred_check
      _
    $region26: #{nonlocal_block_pallas.1} parent=5 // pred_check_branch
      %116 = sbr.rel (%p113) target = $region28
    $region27: #{nonlocal_block_pallas.1} parent=5 // pred_region
      %s117 = ssub.s32 %s8, 1
      %p118 = scmp.lt.s32.totalorder %s13, 1
      %s119 = scalar_select %p118, %s13, 1
      %s120 = smul.addr %s119, 2
      %s121 = smul.addr %s120, 8
      %s122 = scalar_lea.vmem %s0, %s121
      %p123 = pneg %p34
      %p124 = pneg %p31
      %p125 = pneg %p55
      %p126 = pneg %p52
      %p127 = pneg %p81
      %p128 = pneg %p78
      %p129 = scmp.lt.s32.totalorder %s13, 1
      %s130 = scalar_select %p129, %s13, 1
      %s131 = smul.addr %s130, 2
      %s132 = smul.addr %s131, 8
      %s133 = scalar_lea.vmem %s2, %s132
      %p134 = scmp.lt.s32.totalorder %s13, 1
      %s135 = scalar_select %p134, %s13, 1
      %s136 = smul.addr %s135, 2
      %s137 = smul.addr %s136, 8
      %s138 = scalar_lea.vmem %s0, %s137
      %p139 = scmp.lt.s32.totalorder %s13, 1
      %s140 = scalar_select %p139, %s13, 1
      %s141 = smul.addr %s140, 2
      %s142 = smul.addr %s141, 8
      %s143 = scalar_lea.vmem %s2, %s142
      %v144 = vld [vmem:[%s138] sm:$0xff]
      %v145 = vld [vmem:[%s138 + $0x8] sm:$0xff]
      %v146 = vld [vmem:[%s1] sm:$0xff]
      %v147 = vld [vmem:[%s1 + $0x8] sm:$0xff]
      %v148 = vld [vmem:[%s1 + $0x10] sm:$0xff]
      %v149 = vld [vmem:[%s1 + $0x18] sm:$0xff]
      %v150 = vld [vmem:[%s1 + $0x20] sm:$0xff]
      %v151 = vld [vmem:[%s1 + $0x28] sm:$0xff]
      %v152 = vld [vmem:[%s1 + $0x30] sm:$0xff]
      %v153 = vld [vmem:[%s1 + $0x38] sm:$0xff]
      %vm154 = vcmask 64512
      %v156 = vsel %vm154, %v149, 0
      %v159 = vsel %vm154, %v150, 0
      %v162 = vsel %vm154, %v151, 0
      %164 = vmatprep.subr.mxu0 0.0
      %165 = vmatpush1.msra.mxu0 %v145
      %166 = vmatprep.subr.mxu0 0.0
      %167 = vmatpush1.msra.mxu0 0.0
      %168 = vmatprep.subr.mxu0 0.0
      %169 = vmatpush1.msra.mxu0 0.0
      %170 = vmatprep.subr.mxu0 0.0
      %171 = vmatpush1.msra.mxu0 0.0
      %172 = vmatprep.subr.mxu0 0.0
      %173 = vmatpush1.msra.mxu0 0.0
      %174 = vmatprep.subr.mxu0 0.0
      %175 = vmatpush1.msra.mxu0 0.0
      %176 = vmatprep.subr.mxu0 0.0
      %177 = vmatpush1.msra.mxu0 0.0
      %178 = vmatprep.subr.mxu0 0.0
      %179 = vmatpush1.msra.mxu0 0.0
      %180 = vmatprep.subr.mxu0 0.0
      %181 = vmatpush1.msra.mxu0 0.0
      %182 = vmatprep.subr.mxu0 0.0
      %183 = vmatpush1.msra.mxu0 0.0
      %184 = vmatprep.subr.mxu0 0.0
      %185 = vmatpush1.msra.mxu0 0.0
      %186 = vmatprep.subr.mxu0 0.0
      %187 = vmatpush1.msra.mxu0 0.0
      %188 = vmatprep.subr.mxu0 0.0
      %189 = vmatpush1.msra.mxu0 0.0
      %190 = vmatprep.subr.mxu0 0.0
      %191 = vmatpush1.msra.mxu0 0.0
      %192 = vmatprep.subr.mxu0 0.0
      %193 = vmatpush1.msra.mxu0 0.0
      %194 = vmatprep.subr.mxu0 0.0
      %195 = vmatpush1.msra.mxu0 0.0
      %196 = vmatprep.subr.mxu0 0.0
      %197 = vmatpush1.msra.mxu0 0.0
      %198 = vmatprep.subr.mxu0 0.0
      %199 = vmatpush1.msra.mxu0 0.0
      %200 = vmatprep.subr.mxu0 0.0
      %201 = vmatpush1.msra.mxu0 0.0
      %202 = vmatprep.subr.mxu0 0.0
      %203 = vmatpush1.msra.mxu0 0.0
      %204 = vmatprep.subr.mxu0 0.0
      %205 = vmatpush1.msra.mxu0 0.0
      %206 = vmatprep.subr.mxu0 0.0
      %207 = vmatpush1.msra.mxu0 0.0
      %208 = vmatprep.subr.mxu0 0.0
      %209 = vmatpush1.msra.mxu0 0.0
      %210 = vmatprep.subr.mxu0 0.0
      %211 = vmatpush1.msra.mxu0 0.0
      %212 = vmatprep.subr.mxu0 0.0
      %213 = vmatpush1.msra.mxu0 0.0
      %214 = vmatprep.subr.mxu0 0.0
      %215 = vmatpush1.msra.mxu0 0.0
      %216 = vmatprep.subr.mxu0 0.0
      %217 = vmatpush1.msra.mxu0 0.0
      %218 = vmatprep.subr.mxu0 0.0
      %219 = vmatpush1.msra.mxu0 0.0
      %220 = vmatprep.subr.mxu0 0.0
      %221 = vmatpush1.msra.mxu0 0.0
      %222 = vmatprep.subr.mxu0 0.0
      %223 = vmatpush1.msra.mxu0 0.0
      %224 = vmatprep.subr.mxu0 0.0
      %225 = vmatpush1.msra.mxu0 0.0
      %226 = vmatprep.subr.mxu0 0.0
      %227 = vmatpush1.msra.mxu0 0.0
      %228 = vmatprep.mubr.f32.mxu0 0.0
      %229 = vmatmul.mubr.f32.gmra.mrb[0].mxu0 %v156
      %v230 = vpop.f32.mrb[0].mxu0
      %v231 = vadd.f32 0.0, %v230
      %v232 = vpop.f32.mrb[0].mxu0
      %233 = vmatprep.mubr.f32.mxu0 0.0
      %234 = vmatmul.mubr.f32.gmra.mrb[0].mxu0 %v159
      %v235 = vpop.f32.mrb[0].mxu0
      %v236 = vadd.f32 0.0, %v235
      %v237 = vpop.f32.mrb[0].mxu0
      %238 = vmatprep.mubr.f32.mxu0 0.0
      %239 = vmatmul.mubr.f32.gmra.mrb[0].mxu0 %v162
      %v240 = vpop.f32.mrb[0].mxu0
      %v241 = vadd.f32 0.0, %v240
      %v242 = vpop.f32.mrb[0].mxu0
      %243 = vdwg.mxu0
      %v245 = vsel %vm154, %v146, 0
      %v248 = vsel %vm154, %v147, 0
      %v251 = vsel %vm154, %v148, 0
      %253 = vmatprep.subr.mxu0 0.0
      %254 = vmatpush1.msra.mxu0 %v144
      %255 = vmatprep.subr.mxu0 0.0
      %256 = vmatpush1.msra.mxu0 0.0
      %257 = vmatprep.subr.mxu0 0.0
      %258 = vmatpush1.msra.mxu0 0.0
      %259 = vmatprep.subr.mxu0 0.0
      %260 = vmatpush1.msra.mxu0 0.0
      %261 = vmatprep.subr.mxu0 0.0
      %262 = vmatpush1.msra.mxu0 0.0
      %263 = vmatprep.subr.mxu0 0.0
      %264 = vmatpush1.msra.mxu0 0.0
      %265 = vmatprep.subr.mxu0 0.0
      %266 = vmatpush1.msra.mxu0 0.0
      %267 = vmatprep.subr.mxu0 0.0
      %268 = vmatpush1.msra.mxu0 0.0
      %269 = vmatprep.subr.mxu0 0.0
      %270 = vmatpush1.msra.mxu0 0.0
      %271 = vmatprep.subr.mxu0 0.0
      %272 = vmatpush1.msra.mxu0 0.0
      %273 = vmatprep.subr.mxu0 0.0
      %274 = vmatpush1.msra.mxu0 0.0
      %275 = vmatprep.subr.mxu0 0.0
      %276 = vmatpush1.msra.mxu0 0.0
      %277 = vmatprep.subr.mxu0 0.0
      %278 = vmatpush1.msra.mxu0 0.0
      %279 = vmatprep.subr.mxu0 0.0
      %280 = vmatpush1.msra.mxu0 0.0
      %281 = vmatprep.subr.mxu0 0.0
      %282 = vmatpush1.msra.mxu0 0.0
      %283 = vmatprep.subr.mxu0 0.0
      %284 = vmatpush1.msra.mxu0 0.0
      %285 = vmatprep.subr.mxu0 0.0
      %286 = vmatpush1.msra.mxu0 0.0
      %287 = vmatprep.subr.mxu0 0.0
      %288 = vmatpush1.msra.mxu0 0.0
      %289 = vmatprep.subr.mxu0 0.0
      %290 = vmatpush1.msra.mxu0 0.0
      %291 = vmatprep.subr.mxu0 0.0
      %292 = vmatpush1.msra.mxu0 0.0
      %293 = vmatprep.subr.mxu0 0.0
      %294 = vmatpush1.msra.mxu0 0.0
      %295 = vmatprep.subr.mxu0 0.0
      %296 = vmatpush1.msra.mxu0 0.0
      %297 = vmatprep.subr.mxu0 0.0
      %298 = vmatpush1.msra.mxu0 0.0
      %299 = vmatprep.subr.mxu0 0.0
      %300 = vmatpush1.msra.mxu0 0.0
      %301 = vmatprep.subr.mxu0 0.0
      %302 = vmatpush1.msra.mxu0 0.0
      %303 = vmatprep.subr.mxu0 0.0
      %304 = vmatpush1.msra.mxu0 0.0
      %305 = vmatprep.subr.mxu0 0.0
      %306 = vmatpush1.msra.mxu0 0.0
      %307 = vmatprep.subr.mxu0 0.0
      %308 = vmatpush1.msra.mxu0 0.0
      %309 = vmatprep.subr.mxu0 0.0
      %310 = vmatpush1.msra.mxu0 0.0
      %311 = vmatprep.subr.mxu0 0.0
      %312 = vmatpush1.msra.mxu0 0.0
      %313 = vmatprep.subr.mxu0 0.0
      %314 = vmatpush1.msra.mxu0 0.0
      %315 = vmatprep.subr.mxu0 0.0
      %316 = vmatpush1.msra.mxu0 0.0
      %317 = vmatprep.mubr.f32.mxu0 0.0
      %318 = vmatmul.mubr.f32.gmra.mrb[0].mxu0 %v245
      %v319 = vpop.f32.mrb[0].mxu0
      %v320 = vadd.f32 %v231, %v319
      %v321 = vpop.f32.mrb[0].mxu0
      %322 = vmatprep.mubr.f32.mxu0 0.0
      %323 = vmatmul.mubr.f32.gmra.mrb[0].mxu0 %v248
      %v324 = vpop.f32.mrb[0].mxu0
      %v325 = vadd.f32 %v236, %v324
      %v326 = vpop.f32.mrb[0].mxu0
      %327 = vmatprep.mubr.f32.mxu0 0.0
      %328 = vmatmul.mubr.f32.gmra.mrb[0].mxu0 %v251
      %v329 = vpop.f32.mrb[0].mxu0
      %v330 = vadd.f32 %v241, %v329
      %v331 = vpop.f32.mrb[0].mxu0
      %332 = vdwg.mxu0
      %333 = vxpose.xlu0.b32.start [1/16] %v320, 128
      %334 = vxpose.xlu0.b32.cont [2/16] 0.0, 128
      %335 = vxpose.xlu0.b32.cont [3/16] 0.0, 128
      %336 = vxpose.xlu0.b32.cont [4/16] 0.0, 128
      %337 = vxpose.xlu0.b32.cont [5/16] 0.0, 128
      %338 = vxpose.xlu0.b32.cont [6/16] 0.0, 128
      %339 = vxpose.xlu0.b32.cont [7/16] 0.0, 128
      %340 = vxpose.xlu0.b32.cont [8/16] 0.0, 128
      %341 = vxpose.xlu0.b32.cont [9/16] 0.0, 128
      %342 = vxpose.xlu0.b32.cont [10/16] 0.0, 128
      %343 = vxpose.xlu0.b32.cont [11/16] 0.0, 128
      %344 = vxpose.xlu0.b32.cont [12/16] 0.0, 128
      %345 = vxpose.xlu0.b32.cont [13/16] 0.0, 128
      %346 = vxpose.xlu0.b32.cont [14/16] 0.0, 128
      %347 = vxpose.xlu0.b32.cont [15/16] 0.0, 128
      %348 = vxpose.xlu0.b32.end [16/16] 0.0, 128
      %v349 = vpop.trf.xlu0
      %v350 = vpop.trf.xlu0
      %v351 = vpop.trf.xlu0
      %v352 = vpop.trf.xlu0
      %v353 = vpop.trf.xlu0
      %v354 = vpop.trf.xlu0
      %v355 = vpop.trf.xlu0
      %v356 = vpop.trf.xlu0
      %v357 = vpop.trf.xlu0
      %v358 = vpop.trf.xlu0
      %v359 = vpop.trf.xlu0
      %v360 = vpop.trf.xlu0
      %v361 = vpop.trf.xlu0
      %v362 = vpop.trf.xlu0
      %v363 = vpop.trf.xlu0
      %v364 = vpop.trf.xlu0
      %v366 = vsel %vm154, %v349, 0
      %v369 = vsel %vm154, %v350, 0
      %v372 = vsel %vm154, %v351, 0
      %v375 = vsel %vm154, %v352, 0
      %v378 = vsel %vm154, %v353, 0
      %v381 = vsel %vm154, %v354, 0
      %v384 = vsel %vm154, %v355, 0
      %v387 = vsel %vm154, %v356, 0
      %v390 = vsel %vm154, %v357, 0
      %v393 = vsel %vm154, %v358, 0
      %v396 = vsel %vm154, %v359, 0
      %v399 = vsel %vm154, %v360, 0
      %v402 = vsel %vm154, %v361, 0
      %v405 = vsel %vm154, %v362, 0
      %v408 = vsel %vm154, %v363, 0
      %v411 = vsel %vm154, %v364, 0
      %413 = vmatprep.subr.mxu0 0.0
      %414 = vmatpush1.msra.mxu0 %v325
      %415 = vmatprep.subr.mxu0 0.0
      %416 = vmatpush1.msra.mxu0 0.0
      %417 = vmatprep.subr.mxu0 0.0
      %418 = vmatpush1.msra.mxu0 0.0
      %419 = vmatprep.subr.mxu0 0.0
      %420 = vmatpush1.msra.mxu0 0.0
      %421 = vmatprep.subr.mxu0 0.0
      %422 = vmatpush1.msra.mxu0 0.0
      %423 = vmatprep.subr.mxu0 0.0
      %424 = vmatpush1.msra.mxu0 0.0
      %425 = vmatprep.subr.mxu0 0.0
      %426 = vmatpush1.msra.mxu0 0.0
      %427 = vmatprep.subr.mxu0 0.0
      %428 = vmatpush1.msra.mxu0 0.0
      %429 = vmatprep.subr.mxu0 0.0
      %430 = vmatpush1.msra.mxu0 0.0
      %431 = vmatprep.subr.mxu0 0.0
      %432 = vmatpush1.msra.mxu0 0.0
      %433 = vmatprep.subr.mxu0 0.0
      %434 = vmatpush1.msra.mxu0 0.0
      %435 = vmatprep.subr.mxu0 0.0
      %436 = vmatpush1.msra.mxu0 0.0
      %437 = vmatprep.subr.mxu0 0.0
      %438 = vmatpush1.msra.mxu0 0.0
      %439 = vmatprep.subr.mxu0 0.0
      %440 = vmatpush1.msra.mxu0 0.0
      %441 = vmatprep.subr.mxu0 0.0
      %442 = vmatpush1.msra.mxu0 0.0
      %443 = vmatprep.subr.mxu0 0.0
      %444 = vmatpush1.msra.mxu0 0.0
      %445 = vmatprep.subr.mxu0 0.0
      %446 = vmatpush1.msra.mxu0 0.0
      %447 = vmatprep.subr.mxu0 0.0
      %448 = vmatpush1.msra.mxu0 0.0
      %449 = vmatprep.subr.mxu0 0.0
      %450 = vmatpush1.msra.mxu0 0.0
      %451 = vmatprep.subr.mxu0 0.0
      %452 = vmatpush1.msra.mxu0 0.0
      %453 = vmatprep.subr.mxu0 0.0
      %454 = vmatpush1.msra.mxu0 0.0
      %455 = vmatprep.subr.mxu0 0.0
      %456 = vmatpush1.msra.mxu0 0.0
      %457 = vmatprep.subr.mxu0 0.0
      %458 = vmatpush1.msra.mxu0 0.0
      %459 = vmatprep.subr.mxu0 0.0
      %460 = vmatpush1.msra.mxu0 0.0
      %461 = vmatprep.subr.mxu0 0.0
      %462 = vmatpush1.msra.mxu0 0.0
      %463 = vmatprep.subr.mxu0 0.0
      %464 = vmatpush1.msra.mxu0 0.0
      %465 = vmatprep.subr.mxu0 0.0
      %466 = vmatpush1.msra.mxu0 0.0
      %467 = vmatprep.subr.mxu0 0.0
      %468 = vmatpush1.msra.mxu0 0.0
      %469 = vmatprep.subr.mxu0 0.0
      %470 = vmatpush1.msra.mxu0 0.0
      %471 = vmatprep.subr.mxu0 0.0
      %472 = vmatpush1.msra.mxu0 0.0
      %473 = vmatprep.subr.mxu0 0.0
      %474 = vmatpush1.msra.mxu0 0.0
      %475 = vmatprep.subr.mxu0 0.0
      %476 = vmatpush1.msra.mxu0 0.0
      %477 = vmatprep.mubr.f32.mxu0 0.0
      %478 = vmatmul.mubr.f32.gmra.mrb[0].mxu0 %v366
      %v479 = vpop.f32.mrb[0].mxu0
      %v480 = vadd.f32 0.0, %v479
      %v481 = vpop.f32.mrb[0].mxu0
      %482 = vmatprep.mubr.f32.mxu0 0.0
      %483 = vmatmul.mubr.f32.gmra.mrb[0].mxu0 %v369
      %v484 = vpop.f32.mrb[0].mxu0
      %v485 = vadd.f32 0.0, %v484
      %v486 = vpop.f32.mrb[0].mxu0
      %487 = vmatprep.mubr.f32.mxu0 0.0
      %488 = vmatmul.mubr.f32.gmra.mrb[0].mxu0 %v372
      %v489 = vpop.f32.mrb[0].mxu0
      %v490 = vadd.f32 0.0, %v489
      %v491 = vpop.f32.mrb[0].mxu0
      %492 = vmatprep.mubr.f32.mxu0 0.0
      %493 = vmatmul.mubr.f32.gmra.mrb[0].mxu0 %v375
      %v494 = vpop.f32.mrb[0].mxu0
      %v495 = vadd.f32 0.0, %v494
      %v496 = vpop.f32.mrb[0].mxu0
      %497 = vmatprep.mubr.f32.mxu0 0.0
      %498 = vmatmul.mubr.f32.gmra.mrb[0].mxu0 %v378
      %v499 = vpop.f32.mrb[0].mxu0
      %v500 = vadd.f32 0.0, %v499
      %v501 = vpop.f32.mrb[0].mxu0
      %502 = vmatprep.mubr.f32.mxu0 0.0
      %503 = vmatmul.mubr.f32.gmra.mrb[0].mxu0 %v381
      %v504 = vpop.f32.mrb[0].mxu0
      %v505 = vadd.f32 0.0, %v504
      %v506 = vpop.f32.mrb[0].mxu0
      %507 = vmatprep.mubr.f32.mxu0 0.0
      %508 = vmatmul.mubr.f32.gmra.mrb[0].mxu0 %v384
      %v509 = vpop.f32.mrb[0].mxu0
      %v510 = vadd.f32 0.0, %v509
      %v511 = vpop.f32.mrb[0].mxu0
      %512 = vmatprep.mubr.f32.mxu0 0.0
      %513 = vmatmul.mubr.f32.gmra.mrb[0].mxu0 %v387
      %v514 = vpop.f32.mrb[0].mxu0
      %v515 = vadd.f32 0.0, %v514
      %v516 = vpop.f32.mrb[0].mxu0
      %517 = vmatprep.mubr.f32.mxu0 0.0
      %518 = vmatmul.mubr.f32.gmra.mrb[0].mxu0 %v390
      %v519 = vpop.f32.mrb[0].mxu0
      %v520 = vadd.f32 0.0, %v519
      %v521 = vpop.f32.mrb[0].mxu0
      %522 = vmatprep.mubr.f32.mxu0 0.0
      %523 = vmatmul.mubr.f32.gmra.mrb[0].mxu0 %v393
      %v524 = vpop.f32.mrb[0].mxu0
      %v525 = vadd.f32 0.0, %v524
      %v526 = vpop.f32.mrb[0].mxu0
      %527 = vmatprep.mubr.f32.mxu0 0.0
      %528 = vmatmul.mubr.f32.gmra.mrb[0].mxu0 %v396
      %v529 = vpop.f32.mrb[0].mxu0
      %v530 = vadd.f32 0.0, %v529
      %v531 = vpop.f32.mrb[0].mxu0
      %532 = vmatprep.mubr.f32.mxu0 0.0
      %533 = vmatmul.mubr.f32.gmra.mrb[0].mxu0 %v399
      %v534 = vpop.f32.mrb[0].mxu0
      %v535 = vadd.f32 0.0, %v534
      %v536 = vpop.f32.mrb[0].mxu0
      %537 = vmatprep.mubr.f32.mxu0 0.0
      %538 = vmatmul.mubr.f32.gmra.mrb[0].mxu0 %v402
      %v539 = vpop.f32.mrb[0].mxu0
      %v540 = vadd.f32 0.0, %v539
      %v541 = vpop.f32.mrb[0].mxu0
      %542 = vmatprep.mubr.f32.mxu0 0.0
      %543 = vmatmul.mubr.f32.gmra.mrb[0].mxu0 %v405
      %v544 = vpop.f32.mrb[0].mxu0
      %v545 = vadd.f32 0.0, %v544
      %v546 = vpop.f32.mrb[0].mxu0
      %547 = vmatprep.mubr.f32.mxu0 0.0
      %548 = vmatmul.mubr.f32.gmra.mrb[0].mxu0 %v408
      %v549 = vpop.f32.mrb[0].mxu0
      %v550 = vadd.f32 0.0, %v549
      %v551 = vpop.f32.mrb[0].mxu0
      %552 = vmatprep.mubr.f32.mxu0 0.0
      %553 = vmatmul.mubr.f32.gmra.mrb[0].mxu0 %v411
      %v554 = vpop.f32.mrb[0].mxu0
      %v555 = vadd.f32 0.0, %v554
      %v556 = vpop.f32.mrb[0].mxu0
      %557 = vdwg.mxu0
      %558 = vmax.xlane.f32.xlu0 %v480
      %v559 = vpop.xlane.xlu0 %558
      %560 = vmax.xlane.f32.xlu0 %v485
      %v561 = vpop.xlane.xlu0 %560
      %562 = vmax.xlane.f32.xlu0 %v490
      %v563 = vpop.xlane.xlu0 %562
      %564 = vmax.xlane.f32.xlu0 %v495
      %v565 = vpop.xlane.xlu0 %564
      %566 = vmax.xlane.f32.xlu0 %v500
      %v567 = vpop.xlane.xlu0 %566
      %568 = vmax.xlane.f32.xlu0 %v505
      %v569 = vpop.xlane.xlu0 %568
      %570 = vmax.xlane.f32.xlu0 %v510
      %v571 = vpop.xlane.xlu0 %570
      %572 = vmax.xlane.f32.xlu0 %v515
      %v573 = vpop.xlane.xlu0 %572
      %574 = vmax.xlane.f32.xlu0 %v520
      %v575 = vpop.xlane.xlu0 %574
      %576 = vmax.xlane.f32.xlu0 %v525
      %v577 = vpop.xlane.xlu0 %576
      %578 = vmax.xlane.f32.xlu0 %v530
      %v579 = vpop.xlane.xlu0 %578
      %580 = vmax.xlane.f32.xlu0 %v535
      %v581 = vpop.xlane.xlu0 %580
      %582 = vmax.xlane.f32.xlu0 %v540
      %v583 = vpop.xlane.xlu0 %582
      %584 = vmax.xlane.f32.xlu0 %v545
      %v585 = vpop.xlane.xlu0 %584
      %586 = vmax.xlane.f32.xlu0 %v550
      %v587 = vpop.xlane.xlu0 %586
      %588 = vmax.xlane.f32.xlu0 %v555
      %v589 = vpop.xlane.xlu0 %588
      %v590 = vsub.f32 %v480, %v559
      %v591 = vsub.f32 %v485, %v561
      %v592 = vsub.f32 %v490, %v563
      %v593 = vsub.f32 %v495, %v565
      %v594 = vsub.f32 %v500, %v567
      %v595 = vsub.f32 %v505, %v569
      %v596 = vsub.f32 %v510, %v571
      %v597 = vsub.f32 %v515, %v573
      %v598 = vsub.f32 %v520, %v575
      %v599 = vsub.f32 %v525, %v577
      %v600 = vsub.f32 %v530, %v579
      %v601 = vsub.f32 %v535, %v581
      %v602 = vsub.f32 %v540, %v583
      %v603 = vsub.f32 %v545, %v585
      %v604 = vsub.f32 %v550, %v587
      %v605 = vsub.f32 %v555, %v589
      %v606 = vmul.f32 %v590, 1.442695
      %v607 = vpow.pop %v606
      %v608 = vmul.f32 %v591, 1.442695
      %v609 = vpow.pop %v608
      %v610 = vmul.f32 %v592, 1.442695
      %v611 = vpow.pop %v610
      %v612 = vmul.f32 %v593, 1.442695
      %v613 = vpow.pop %v612
      %v614 = vmul.f32 %v594, 1.442695
      %v615 = vpow.pop %v614
      %v616 = vmul.f32 %v595, 1.442695
      %v617 = vpow.pop %v616
      %v618 = vmul.f32 %v596, 1.442695
      %v619 = vpow.pop %v618
      %v620 = vmul.f32 %v597, 1.442695
      %v621 = vpow.pop %v620
      %v622 = vmul.f32 %v598, 1.442695
      %v623 = vpow.pop %v622
      %v624 = vmul.f32 %v599, 1.442695
      %v625 = vpow.pop %v624
      %v626 = vmul.f32 %v600, 1.442695
      %v627 = vpow.pop %v626
      %v628 = vmul.f32 %v601, 1.442695
      %v629 = vpow.pop %v628
      %v630 = vmul.f32 %v602, 1.442695
      %v631 = vpow.pop %v630
      %v632 = vmul.f32 %v603, 1.442695
      %v633 = vpow.pop %v632
      %v634 = vmul.f32 %v604, 1.442695
      %v635 = vpow.pop %v634
      %v636 = vmul.f32 %v605, 1.442695
      %v637 = vpow.pop %v636
      %638 = vadd.xlane.f32.xlu0 %v607
      %v639 = vpop.xlane.xlu0 %638
      %640 = vadd.xlane.f32.xlu0 %v609
      %v641 = vpop.xlane.xlu0 %640
      %642 = vadd.xlane.f32.xlu0 %v611
      %v643 = vpop.xlane.xlu0 %642
      %644 = vadd.xlane.f32.xlu0 %v613
      %v645 = vpop.xlane.xlu0 %644
      %646 = vadd.xlane.f32.xlu0 %v615
      %v647 = vpop.xlane.xlu0 %646
      %648 = vadd.xlane.f32.xlu0 %v617
      %v649 = vpop.xlane.xlu0 %648
      %650 = vadd.xlane.f32.xlu0 %v619
      %v651 = vpop.xlane.xlu0 %650
      %652 = vadd.xlane.f32.xlu0 %v621
      %v653 = vpop.xlane.xlu0 %652
      %654 = vadd.xlane.f32.xlu0 %v623
      %v655 = vpop.xlane.xlu0 %654
      %656 = vadd.xlane.f32.xlu0 %v625
      %v657 = vpop.xlane.xlu0 %656
      %658 = vadd.xlane.f32.xlu0 %v627
      %v659 = vpop.xlane.xlu0 %658
      %660 = vadd.xlane.f32.xlu0 %v629
      %v661 = vpop.xlane.xlu0 %660
      %662 = vadd.xlane.f32.xlu0 %v631
      %v663 = vpop.xlane.xlu0 %662
      %664 = vadd.xlane.f32.xlu0 %v633
      %v665 = vpop.xlane.xlu0 %664
      %666 = vadd.xlane.f32.xlu0 %v635
      %v667 = vpop.xlane.xlu0 %666
      %668 = vadd.xlane.f32.xlu0 %v637
      %v669 = vpop.xlane.xlu0 %668
      %v670 = vrcp.pop %v639
      %v671 = vrcp.pop %v641
      %v672 = vrcp.pop %v643
      %v673 = vrcp.pop %v645
      %v674 = vrcp.pop %v647
      %v675 = vrcp.pop %v649
      %v676 = vrcp.pop %v651
      %v677 = vrcp.pop %v653
      %v678 = vrcp.pop %v655
      %v679 = vrcp.pop %v657
      %v680 = vrcp.pop %v659
      %v681 = vrcp.pop %v661
      %v682 = vrcp.pop %v663
      %v683 = vrcp.pop %v665
      %v684 = vrcp.pop %v667
      %v685 = vrcp.pop %v669
      %v686 = vmul.f32 %v607, %v670
      %v687 = vmul.f32 %v609, %v671
      %v688 = vmul.f32 %v611, %v672
      %v689 = vmul.f32 %v613, %v673
      %v690 = vmul.f32 %v615, %v674
      %v691 = vmul.f32 %v617, %v675
      %v692 = vmul.f32 %v619, %v676
      %v693 = vmul.f32 %v621, %v677
      %v694 = vmul.f32 %v623, %v678
      %v695 = vmul.f32 %v625, %v679
      %v696 = vmul.f32 %v627, %v680
      %v697 = vmul.f32 %v629, %v681
      %v698 = vmul.f32 %v631, %v682
      %v699 = vmul.f32 %v633, %v683
      %v700 = vmul.f32 %v635, %v684
      %v701 = vmul.f32 %v637, %v685
      %702 = vmatprep.subr.mxu0 0.0
      %703 = vmatpush1.msra.mxu0 %v686
      %704 = vmatprep.subr.mxu0 0.0
      %705 = vmatpush1.msra.mxu0 %v687
      %706 = vmatprep.subr.mxu0 0.0
      %707 = vmatpush1.msra.mxu0 %v688
      %708 = vmatprep.subr.mxu0 0.0
      %709 = vmatpush1.msra.mxu0 %v689
      %710 = vmatprep.subr.mxu0 0.0
      %711 = vmatpush1.msra.mxu0 %v690
      %712 = vmatprep.subr.mxu0 0.0
      %713 = vmatpush1.msra.mxu0 %v691
      %714 = vmatprep.subr.mxu0 0.0
      %715 = vmatpush1.msra.mxu0 %v692
      %716 = vmatprep.subr.mxu0 0.0
      %717 = vmatpush1.msra.mxu0 %v693
      %718 = vmatprep.subr.mxu0 0.0
      %719 = vmatpush1.msra.mxu0 %v694
      %720 = vmatprep.subr.mxu0 0.0
      %721 = vmatpush1.msra.mxu0 %v695
      %722 = vmatprep.subr.mxu0 0.0
      %723 = vmatpush1.msra.mxu0 %v696
      %724 = vmatprep.subr.mxu0 0.0
      %725 = vmatpush1.msra.mxu0 %v697
      %726 = vmatprep.subr.mxu0 0.0
      %727 = vmatpush1.msra.mxu0 %v698
      %728 = vmatprep.subr.mxu0 0.0
      %729 = vmatpush1.msra.mxu0 %v699
      %730 = vmatprep.subr.mxu0 0.0
      %731 = vmatpush1.msra.mxu0 %v700
      %732 = vmatprep.subr.mxu0 0.0
      %733 = vmatpush1.msra.mxu0 %v701
      %734 = vmatprep.subr.mxu0 0.0
      %735 = vmatpush1.msra.mxu0 0.0
      %736 = vmatprep.subr.mxu0 0.0
      %737 = vmatpush1.msra.mxu0 0.0
      %738 = vmatprep.subr.mxu0 0.0
      %739 = vmatpush1.msra.mxu0 0.0
      %740 = vmatprep.subr.mxu0 0.0
      %741 = vmatpush1.msra.mxu0 0.0
      %742 = vmatprep.subr.mxu0 0.0
      %743 = vmatpush1.msra.mxu0 0.0
      %744 = vmatprep.subr.mxu0 0.0
      %745 = vmatpush1.msra.mxu0 0.0
      %746 = vmatprep.subr.mxu0 0.0
      %747 = vmatpush1.msra.mxu0 0.0
      %748 = vmatprep.subr.mxu0 0.0
      %749 = vmatpush1.msra.mxu0 0.0
      %750 = vmatprep.subr.mxu0 0.0
      %751 = vmatpush1.msra.mxu0 0.0
      %752 = vmatprep.subr.mxu0 0.0
      %753 = vmatpush1.msra.mxu0 0.0
      %754 = vmatprep.subr.mxu0 0.0
      %755 = vmatpush1.msra.mxu0 0.0
      %756 = vmatprep.subr.mxu0 0.0
      %757 = vmatpush1.msra.mxu0 0.0
      %758 = vmatprep.subr.mxu0 0.0
      %759 = vmatpush1.msra.mxu0 0.0
      %760 = vmatprep.subr.mxu0 0.0
      %761 = vmatpush1.msra.mxu0 0.0
      %762 = vmatprep.subr.mxu0 0.0
      %763 = vmatpush1.msra.mxu0 0.0
      %764 = vmatprep.subr.mxu0 0.0
      %765 = vmatpush1.msra.mxu0 0.0
      %766 = vmatprep.mubr.f32.mxu0 0.0
      %767 = vmatmul.mubr.f32.gmra.mrb[0].mxu0 %v330
      %v768 = vpop.f32.mrb[0].mxu0
      %v769 = vadd.f32 0.0, %v768
      %v770 = vpop.f32.mrb[0].mxu0
      %771 = vdwg.mxu0
      %v773 = vsel %vm154, %v152, 0
      %v776 = vsel %vm154, %v153, 0
      %778 = vmatprep.subr.mxu0 0.0
      %779 = vmatpush1.msra.mxu0 %v769
      %780 = vmatprep.subr.mxu0 0.0
      %781 = vmatpush1.msra.mxu0 0.0
      %782 = vmatprep.subr.mxu0 0.0
      %783 = vmatpush1.msra.mxu0 0.0
      %784 = vmatprep.subr.mxu0 0.0
      %785 = vmatpush1.msra.mxu0 0.0
      %786 = vmatprep.subr.mxu0 0.0
      %787 = vmatpush1.msra.mxu0 0.0
      %788 = vmatprep.subr.mxu0 0.0
      %789 = vmatpush1.msra.mxu0 0.0
      %790 = vmatprep.subr.mxu0 0.0
      %791 = vmatpush1.msra.mxu0 0.0
      %792 = vmatprep.subr.mxu0 0.0
      %793 = vmatpush1.msra.mxu0 0.0
      %794 = vmatprep.subr.mxu0 0.0
      %795 = vmatpush1.msra.mxu0 0.0
      %796 = vmatprep.subr.mxu0 0.0
      %797 = vmatpush1.msra.mxu0 0.0
      %798 = vmatprep.subr.mxu0 0.0
      %799 = vmatpush1.msra.mxu0 0.0
      %800 = vmatprep.subr.mxu0 0.0
      %801 = vmatpush1.msra.mxu0 0.0
      %802 = vmatprep.subr.mxu0 0.0
      %803 = vmatpush1.msra.mxu0 0.0
      %804 = vmatprep.subr.mxu0 0.0
      %805 = vmatpush1.msra.mxu0 0.0
      %806 = vmatprep.subr.mxu0 0.0
      %807 = vmatpush1.msra.mxu0 0.0
      %808 = vmatprep.subr.mxu0 0.0
      %809 = vmatpush1.msra.mxu0 0.0
      %810 = vmatprep.subr.mxu0 0.0
      %811 = vmatpush1.msra.mxu0 0.0
      %812 = vmatprep.subr.mxu0 0.0
      %813 = vmatpush1.msra.mxu0 0.0
      %814 = vmatprep.subr.mxu0 0.0
      %815 = vmatpush1.msra.mxu0 0.0
      %816 = vmatprep.subr.mxu0 0.0
      %817 = vmatpush1.msra.mxu0 0.0
      %818 = vmatprep.subr.mxu0 0.0
      %819 = vmatpush1.msra.mxu0 0.0
      %820 = vmatprep.subr.mxu0 0.0
      %821 = vmatpush1.msra.mxu0 0.0
      %822 = vmatprep.subr.mxu0 0.0
      %823 = vmatpush1.msra.mxu0 0.0
      %824 = vmatprep.subr.mxu0 0.0
      %825 = vmatpush1.msra.mxu0 0.0
      %826 = vmatprep.subr.mxu0 0.0
      %827 = vmatpush1.msra.mxu0 0.0
      %828 = vmatprep.subr.mxu0 0.0
      %829 = vmatpush1.msra.mxu0 0.0
      %830 = vmatprep.subr.mxu0 0.0
      %831 = vmatpush1.msra.mxu0 0.0
      %832 = vmatprep.subr.mxu0 0.0
      %833 = vmatpush1.msra.mxu0 0.0
      %834 = vmatprep.subr.mxu0 0.0
      %835 = vmatpush1.msra.mxu0 0.0
      %836 = vmatprep.subr.mxu0 0.0
      %837 = vmatpush1.msra.mxu0 0.0
      %838 = vmatprep.subr.mxu0 0.0
      %839 = vmatpush1.msra.mxu0 0.0
      %840 = vmatprep.subr.mxu0 0.0
      %841 = vmatpush1.msra.mxu0 0.0
      %842 = vmatprep.mubr.f32.mxu0 0.0
      %843 = vmatmul.mubr.f32.gmra.mrb[0].mxu0 %v773
      %v844 = vpop.f32.mrb[0].mxu0
      %v845 = vadd.f32 0.0, %v844
      %v846 = vpop.f32.mrb[0].mxu0
      %847 = vmatprep.mubr.f32.mxu0 0.0
      %848 = vmatmul.mubr.f32.gmra.mrb[0].mxu0 %v776
      %v849 = vpop.f32.mrb[0].mxu0
      %v850 = vadd.f32 0.0, %v849
      %v851 = vpop.f32.mrb[0].mxu0
      %852 = vdwg.mxu0
      %v853 = vadd.f32 %v144, %v845
      %v854 = vadd.f32 %v145, %v850
      %855 = vst [vmem:[%s143] sm:$0xff] %v853
      %856 = vst [vmem:[%s143 + $0x8] sm:$0xff] %v854
      %p857 = scmp.lt.s32.totalorder %s13, 1
      %s858 = scalar_select %p857, %s13, 1
      %s859 = smul.addr %s858, 2
      %s860 = smul.addr %s859, 8
      %s861 = scalar_lea.vmem %s2, %s860
      // Predicated region
      $region29: #{nonlocal_block_pallas.1} parent=27 // pred_check
        %p862 = pneg %p78
      $region30: #{nonlocal_block_pallas.1} parent=27 // pred_check_branch
        %864 = sbr.rel (%p862) target = $region32
      $region31: #{nonlocal_block_pallas.1} parent=27 // pred_region
        _
      $region32: #{nonlocal_block_pallas.1} parent=27 // pred_fallthru
        _
    $region28: #{nonlocal_block_pallas.1} parent=5 // pred_fallthru
      _
    %p865 = scmp.le.s32.totalorder 2, %s8
    // Predicated region
    $region33: #{nonlocal_block_pallas.1} parent=5 // pred_check
      %p866 = pneg %p865
    $region34: #{nonlocal_block_pallas.1} parent=5 // pred_check_branch
      %868 = sbr.rel (%p866) target = $region36
    $region35: #{nonlocal_block_pallas.1} parent=5 // pred_region
      %s869 = ssub.s32 %s8, 2
      // Predicated region
      $region37: #{nonlocal_block_pallas.1} parent=35 // pred_check
        %p870 = pneg %p84
      $region38: #{nonlocal_block_pallas.1} parent=35 // pred_check_branch
        %872 = sbr.rel (%p870) target = $region40
      $region39: #{nonlocal_block_pallas.1} parent=35 // pred_region
        %p873 = scmp.lt.s32.totalorder %s14, 1
        %s874 = scalar_select %p873, %s14, 1
        %s875 = smul.addr %s874, 2
        %s876 = smul.addr %s875, 8
        %s877 = scalar_lea.vmem %s2, %s876
      $region40: #{nonlocal_block_pallas.1} parent=35 // pred_fallthru
        _
    $region36: #{nonlocal_block_pallas.1} parent=5 // pred_fallthru
      _
  $region6: #{nonlocal_block_pallas.1} parent=0 // loop_footer
    %s12 = sadd.s32 1, %s8
  $region7: #{nonlocal_block_pallas.1} parent=0 // loop_footer_branch
    %7 = sbr.rel target = $region3
  $region8: #{nonlocal_block_pallas.1} parent=0 // loop_exit
    _

</llo_original>
